<compile_context>
chip_gen: v7x
topology: tpu7x:2x2x1
jax: 0.10.0
libtpu: 0.0.40
codegen_flags: <defaults>
</compile_context>

<pallas_src>
import functools

import jax
import jax.numpy as jnp
from jax.experimental import pallas as pl
from jax.experimental.pallas import tpu as pltpu


def _round_up(x, m):
    return ((x + m - 1) // m) * m


def ptb_head_kernel(x_ref, w1_ref, b1_ref, w2_ref, b2_ref, o_ref):
    # Features arrive f32 from HBM; cast to bf16 in-kernel (VPU, hidden under
    # the DMA critical path) so both matmuls run as bf16 MXU ops.
    x = x_ref[...].astype(jnp.bfloat16)
    # fc1: bf16 MXU matmul, f32 accumulate; bias add + ReLU in f32 on the VPU.
    h = jnp.dot(x, w1_ref[...], preferred_element_type=jnp.float32)
    h = jnp.maximum(h + b1_ref[...], 0.0)
    # fc2: bf16 MXU matmul into a lane-dense (tb, 128) padded output tile.
    z = jnp.dot(h.astype(jnp.bfloat16), w2_ref[...],
                preferred_element_type=jnp.float32)
    z = z + b2_ref[...]
    # Sigmoid in f32 (EUP), stored as bf16 (halves writeback). Padded lanes
    # hold sigmoid(0)=0.5 and are sliced off in the wrapper.
    o_ref[...] = jax.nn.sigmoid(z).astype(o_ref.dtype)


def prepare_params(w1, b1, w2, b2, c_pad=128):
    """One-time weight prep (outside the per-call path): bf16 casts + lane pad."""
    H = w1.shape[1]
    C = w2.shape[1]
    assert C <= c_pad
    w1_bf = w1.astype(jnp.bfloat16)                                   # (512, 128) bf16
    b1_row = b1.reshape(1, H).astype(jnp.float32)                     # (1, 128) f32
    w2_pad = (jnp.zeros((H, c_pad), jnp.float32)
              .at[:, :C].set(w2).astype(jnp.bfloat16))                # (128, 128) bf16
    b2_pad = jnp.zeros((1, c_pad), jnp.float32).at[0, :C].set(b2)     # (1, 128) f32
    return w1_bf, b1_row, w2_pad, b2_pad


@functools.partial(jax.jit, static_argnames=("n_classes", "block_b"))
def ptb_model_forward(feat, w1_bf, b1_row, w2_pad, b2_pad, *, n_classes,
                      block_b=4096):
    """feat: (B, 512) f32; returns (B, n_classes) f32 = sigmoid(fc2(relu(fc1(feat))))."""
    B, F = feat.shape
    H = w1_bf.shape[1]
    C_PAD = w2_pad.shape[1]

    # Batch tile: multiple of 8 sublanes; clamp so double-buffered f32 x tile +
    # bf16 out tile + resident weights stay under ~28 MiB (fits the 32 MiB
    # scoped-VMEM default on every generation; v7x physical is 64 MiB).
    bytes_per_row = 2 * F * 4 + 2 * C_PAD * 2          # x (f32, 2 bufs) + out (bf16, 2 bufs)
    tb_vmem_cap = max(8, ((28 * 2**20 - 512 * 1024) // bytes_per_row) // 8 * 8)
    tb = min(block_b, tb_vmem_cap, _round_up(B, 8))
    # At large B make sure there are >= 2 grid steps so the "parallel" axis can
    # shard across v7x's two TensorCores (a 1-step grid leaves TC1 idle).
    if B >= 32 and pl.cdiv(B, tb) < 2:
        tb = _round_up(pl.cdiv(B, 2), 8)

    grid = (pl.cdiv(B, tb),)                            # partial last block masked by Pallas

    cost = pl.CostEstimate(
        flops=2 * B * (F * H + H * C_PAD),
        transcendentals=B * C_PAD,                      # sigmoid
        bytes_accessed=(B * F * 4                       # f32 features in
                        + w1_bf.size * 2 + w2_pad.size * 2
                        + b1_row.size * 4 + b2_pad.size * 4
                        + B * C_PAD * 2),               # bf16 out
    )

    out = pl.pallas_call(
        ptb_head_kernel,
        out_shape=jax.ShapeDtypeStruct((B, C_PAD), jnp.bfloat16),
        grid_spec=pltpu.PrefetchScalarGridSpec(
            num_scalar_prefetch=0,
            grid=grid,
            in_specs=[
                pl.BlockSpec((tb, F), lambda i: (i, 0)),      # x tile, pipelined over batch
                pl.BlockSpec((F, H), lambda i: (0, 0)),       # w1: VMEM-resident
                pl.BlockSpec((1, H), lambda i: (0, 0)),       # b1
                pl.BlockSpec((H, C_PAD), lambda i: (0, 0)),   # w2 (lane-padded)
                pl.BlockSpec((1, C_PAD), lambda i: (0, 0)),   # b2 (lane-padded)
            ],
            out_specs=pl.BlockSpec((tb, C_PAD), lambda i: (i, 0)),
        ),
        compiler_params=pltpu.CompilerParams(
            dimension_semantics=("parallel",),   # both TCs on v7x when grid >= 2
        ),
        cost_estimate=cost,
    )(feat, w1_bf, b1_row, w2_pad, b2_pad)

    # Strip lane padding back to the real class count; upcast for downstream use.
    return out[:, :n_classes].astype(jnp.float32)


def init_params(key, in_dim=512, hidden=128, n_classes=5):
    """Deterministic init mimicking nn.Linear's uniform(-1/sqrt(fan_in), 1/sqrt(fan_in))."""
    k1, k2, k3, k4 = jax.random.split(key, 4)
    lim1 = 1.0 / jnp.sqrt(in_dim)
    lim2 = 1.0 / jnp.sqrt(hidden)
    w1 = jax.random.uniform(k1, (in_dim, hidden), jnp.float32, -lim1, lim1)
    b1 = jax.random.uniform(k2, (hidden,), jnp.float32, -lim1, lim1)
    w2 = jax.random.uniform(k3, (hidden, n_classes), jnp.float32, -lim2, lim2)
    b2 = jax.random.uniform(k4, (n_classes,), jnp.float32, -lim2, lim2)
    return w1, b1, w2, b2


if __name__ == "__main__":
    key = jax.random.PRNGKey(0)
    kx, kp = jax.random.split(key)

    B, F, H, C = 8, 512, 128, 5
    # Stand-in for head.penultimate_layer(encoder.encode(raw_signal)).
    feat = jax.random.normal(kx, (B, F), jnp.float32)
    w1, b1, w2, b2 = init_params(kp, F, H, C)

    # One-time weight prep (hoisted out of the per-call path).
    w1_bf, b1_row, w2_pad, b2_pad = prepare_params(w1, b1, w2, b2)

    out = ptb_model_forward(feat, w1_bf, b1_row, w2_pad, b2_pad, n_classes=C)
    out = jax.block_until_ready(out)
    assert out.shape == (B, C)

    # Pure-JAX f32 reference; loose tolerance since MXU operands and the stored
    # output are bf16 (sigmoid outputs live in [0, 1], so 2e-2 is generous).
    ref_f32 = jax.nn.sigmoid(jnp.maximum(feat @ w1 + b1, 0.0) @ w2 + b2)
    assert jnp.allclose(out, ref_f32, atol=2e-2, rtol=2e-2), "mismatch vs f32 reference"

    # Tighter check vs. a reference matching the kernel math (bf16 operands,
    # f32 accumulate, bf16 output rounding).
    ref_bf = jax.nn.sigmoid(
        jnp.dot(
            jnp.maximum(
                jnp.dot(feat.astype(jnp.bfloat16), w1.astype(jnp.bfloat16),
                        preferred_element_type=jnp.float32) + b1, 0.0
            ).astype(jnp.bfloat16),
            w2.astype(jnp.bfloat16),
            preferred_element_type=jnp.float32,
        ) + b2
    ).astype(jnp.bfloat16).astype(jnp.float32)
    assert jnp.allclose(out, ref_bf, atol=1e-2, rtol=1e-2), "mismatch vs bf16 reference"

    print("KERNEL_OK")
</pallas_src>

<mosaic_0001>
module attributes {stable_mosaic.version = 11 : i64} {
  func.func @ptb_head_kernel(%arg0: i32, %arg1: memref<8x512xf32, #tpu.memory_space<vmem>>, %arg2: memref<512x128xbf16, #tpu.memory_space<vmem>>, %arg3: memref<1x128xf32, #tpu.memory_space<vmem>>, %arg4: memref<128x128xbf16, #tpu.memory_space<vmem>>, %arg5: memref<1x128xf32, #tpu.memory_space<vmem>>, %arg6: memref<8x128xbf16, #tpu.memory_space<vmem>>) attributes {dimension_semantics = [#tpu.dimension_semantics<parallel>], iteration_bounds = array<i64: 1>, scalar_prefetch = 0 : i64, scratch_operands = 0 : i64, tpu.core_type = #tpu.core_type<tc>, window_params = [{transform_indices = @transform_0, window_bounds = array<i64: 8, 512>}, {pipeline_mode = #tpu.pipeline_mode<synchronous>, transform_indices = @transform_1, window_bounds = array<i64: 512, 128>}, {pipeline_mode = #tpu.pipeline_mode<synchronous>, transform_indices = @transform_2, window_bounds = array<i64: 1, 128>}, {pipeline_mode = #tpu.pipeline_mode<synchronous>, transform_indices = @transform_3, window_bounds = array<i64: 128, 128>}, {pipeline_mode = #tpu.pipeline_mode<synchronous>, transform_indices = @transform_4, window_bounds = array<i64: 1, 128>}, {transform_indices = @transform_5, window_bounds = array<i64: 8, 128>}]} {
    %c0 = arith.constant 0 : index
    %c0_0 = arith.constant 0 : index
    %0 = vector.load %arg1[%c0, %c0_0] : memref<8x512xf32, #tpu.memory_space<vmem>>, vector<8x512xf32>
    %1 = arith.truncf %0 : vector<8x512xf32> to vector<8x512xbf16>
    %c0_1 = arith.constant 0 : index
    %c0_2 = arith.constant 0 : index
    %2 = vector.load %arg2[%c0_1, %c0_2] : memref<512x128xbf16, #tpu.memory_space<vmem>>, vector<512x128xbf16>
    %cst = arith.constant dense<0.000000e+00> : vector<8x128xf32>
    %3 = tpu.matmul %1, %2, %cst {dimension_numbers = #tpu.dot_dimension_numbers<[1], [0], [0], [1], [0, 0, 1, 1], [], []>} : vector<8x512xbf16>, vector<512x128xbf16>, vector<8x128xf32> -> vector<8x128xf32>
    %c0_3 = arith.constant 0 : index
    %c0_4 = arith.constant 0 : index
    %4 = vector.load %arg3[%c0_3, %c0_4] : memref<1x128xf32, #tpu.memory_space<vmem>>, vector<1x128xf32>
    %5 = vector.broadcast %4 : vector<1x128xf32> to vector<8x128xf32>
    %6 = arith.addf %3, %5 : vector<8x128xf32>
    %cst_5 = arith.constant 0.000000e+00 : f32
    %7 = vector.broadcast %cst_5 : f32 to vector<8x128xf32>
    %8 = arith.maximumf %6, %7 : vector<8x128xf32>
    %9 = arith.truncf %8 : vector<8x128xf32> to vector<8x128xbf16>
    %c0_6 = arith.constant 0 : index
    %c0_7 = arith.constant 0 : index
    %10 = vector.load %arg4[%c0_6, %c0_7] : memref<128x128xbf16, #tpu.memory_space<vmem>>, vector<128x128xbf16>
    %cst_8 = arith.constant dense<0.000000e+00> : vector<8x128xf32>
    %11 = tpu.matmul %9, %10, %cst_8 {dimension_numbers = #tpu.dot_dimension_numbers<[1], [0], [0], [1], [0, 0, 1, 1], [], []>} : vector<8x128xbf16>, vector<128x128xbf16>, vector<8x128xf32> -> vector<8x128xf32>
    %c0_9 = arith.constant 0 : index
    %c0_10 = arith.constant 0 : index
    %12 = vector.load %arg5[%c0_9, %c0_10] : memref<1x128xf32, #tpu.memory_space<vmem>>, vector<1x128xf32>
    %13 = vector.broadcast %12 : vector<1x128xf32> to vector<8x128xf32>
    %14 = arith.addf %11, %13 : vector<8x128xf32>
    %15 = arith.negf %14 : vector<8x128xf32>
    %16 = math.exp %15 : vector<8x128xf32>
    %cst_11 = arith.constant 1.000000e+00 : f32
    %17 = vector.broadcast %cst_11 : f32 to vector<8x128xf32>
    %18 = arith.addf %17, %16 : vector<8x128xf32>
    %19 = arith.divf %17, %18 : vector<8x128xf32>
    %20 = arith.truncf %19 : vector<8x128xf32> to vector<8x128xbf16>
    %c0_12 = arith.constant 0 : index
    %c0_13 = arith.constant 0 : index
    %21 = vector.load %arg6[%c0_12, %c0_13] : memref<8x128xbf16, #tpu.memory_space<vmem>>, vector<8x128xbf16>
    tpu.vector_store %arg6[%c0_12, %c0_13], %20 {strides = array<i32>} : memref<8x128xbf16, #tpu.memory_space<vmem>>, vector<8x128xbf16>,
    return
  }
  func.func @transform_0(%arg0: i32) -> (i32, i32) {
    %c0_i32 = arith.constant 0 : i32
    %c0_i32_0 = arith.constant 0 : i32
    return %arg0, %c0_i32 : i32, i32
  }
  func.func @transform_1(%arg0: i32) -> (i32, i32) {
    %c0_i32 = arith.constant 0 : i32
    %c0_i32_0 = arith.constant 0 : i32
    %c0_i32_1 = arith.constant 0 : i32
    return %c0_i32, %c0_i32_0 : i32, i32
  }
  func.func @transform_2(%arg0: i32) -> (i32, i32) {
    %c0_i32 = arith.constant 0 : i32
    %c0_i32_0 = arith.constant 0 : i32
    %c0_i32_1 = arith.constant 0 : i32
    return %c0_i32, %c0_i32_0 : i32, i32
  }
  func.func @transform_3(%arg0: i32) -> (i32, i32) {
    %c0_i32 = arith.constant 0 : i32
    %c0_i32_0 = arith.constant 0 : i32
    %c0_i32_1 = arith.constant 0 : i32
    return %c0_i32, %c0_i32_0 : i32, i32
  }
  func.func @transform_4(%arg0: i32) -> (i32, i32) {
    %c0_i32 = arith.constant 0 : i32
    %c0_i32_0 = arith.constant 0 : i32
    %c0_i32_1 = arith.constant 0 : i32
    return %c0_i32, %c0_i32_0 : i32, i32
  }
  func.func @transform_5(%arg0: i32) -> (i32, i32) {
    %c0_i32 = arith.constant 0 : i32
    %c0_i32_0 = arith.constant 0 : i32
    return %arg0, %c0_i32 : i32, i32
  }
}

</mosaic_0001>

<llo_original>
// kernel: ptb_model_forward.1
$region0: #{ptb_model_forward.1}
  #allocation0 [shape = 'u32[]', space=smem, size = 0x4, offset = 0x4, fixed_abs, tag = 'smem constant byte address 0x4 - core index']
  #allocation1 [shape = 'u32[144,128]{1,0:T(1,128)}', space=vmem, size = 0x12000, scoped, tag = 'internal scratch']
  %s0 = inlined_call_operand.hbm [shape: f32[8,512], index: 0, kind: input, shape index: {}]
  %s1 = inlined_call_operand.hbm [shape: bf16[512,128], index: 1, kind: input, shape index: {}]
  %s2 = inlined_call_operand.vmem [shape: f32[1,128], index: 2, kind: input, shape index: {}]
  %s3 = inlined_call_operand.hbm [shape: bf16[128,128], index: 3, kind: input, shape index: {}]
  %s4 = inlined_call_operand.vmem [shape: f32[1,128], index: 4, kind: input, shape index: {}]
  %s5 = inlined_call_operand.vmem [shape: bf16[8,128], index: 5, kind: output, shape index: {}]
  %s6 = sld [smem:[#allocation0]]
  $region42: #{ptb_model_forward.1} parent=0
    _
  %s8 = ssub.s32 1, %s6
  %s9 = scalar_select 0, %s8, %s6
  $region1: #{ptb_model_forward.1} parent=0
    #allocation2 [shape = 'u8[16384]{0}', space=vmem, size = 0x4000, scoped, tag = 'input window, operand 0, single buffered']
    #allocation3 [shape = 's32[1]{0}', space=sflag, size = 0x4, scoped, tag = 'scoped memory for ptb_model_forward.1']
    #allocation4 [shape = 'u8[131072]{0}', space=vmem, size = 0x20000, scoped, tag = 'input window, operand 1, single buffered']
    #allocation5 [shape = 's32[1]{0}', space=sflag, size = 0x4, scoped, tag = 'scoped memory for ptb_model_forward.1']
    #allocation6 [shape = 'u8[32768]{0}', space=vmem, size = 0x8000, scoped, tag = 'input window, operand 3, single buffered']
    %10 = vsyncpa [#allocation3], 0
    %11 = vsyncpa [#allocation5], 0
    // Predicated region
    $region2: #{ptb_model_forward.1} parent=1 // pred_check
      _
    $region3: #{ptb_model_forward.1} parent=1 // pred_check_branch
      %13 = sbr.rel (0) target = $region5
    $region4: #{ptb_model_forward.1} parent=1 // pred_region
      %s15 = ssub.s32 512, 512
      %16 = vsyncadd [#allocation3], %s15
      %s18 = sshll.u32 [#allocation2], 4
      %s19 = int_to_ptr.vmem [resolvable:$true] %s18
      %21 = dma.hbm_to_vmem [thread:$0]  %s0, 512, %s19, [#allocation3]
    $region5: #{ptb_model_forward.1} parent=1 // pred_fallthru
      _
    // Predicated region
    $region6: #{ptb_model_forward.1} parent=1 // pred_check
      _
    $region7: #{ptb_model_forward.1} parent=1 // pred_check_branch
      %23 = sbr.rel (0) target = $region9
    $region8: #{ptb_model_forward.1} parent=1 // pred_region
      %s25 = ssub.s32 4096, 4096
      %26 = vsyncadd [#allocation5], %s25
      %s27 = sshll.u32 [#allocation4], 4
      %s28 = int_to_ptr.vmem [resolvable:$true] %s27
      %33 = dma.hbm_to_vmem [thread:$0]  %s1, 4096, %s28, [#allocation5], 64, 64, 4
    $region9: #{ptb_model_forward.1} parent=1 // pred_fallthru
      _
    // Predicated region
    $region10: #{ptb_model_forward.1} parent=1 // pred_check
      _
    $region11: #{ptb_model_forward.1} parent=1 // pred_check_branch
      %35 = sbr.rel (0) target = $region13
    $region12: #{ptb_model_forward.1} parent=1 // pred_region
      _
    $region13: #{ptb_model_forward.1} parent=1 // pred_fallthru
      _
    // Predicated region
    $region14: #{ptb_model_forward.1} parent=1 // pred_check
      _
    $region15: #{ptb_model_forward.1} parent=1 // pred_check_branch
      %37 = sbr.rel (0) target = $region17
    $region16: #{ptb_model_forward.1} parent=1 // pred_region
      %s39 = ssub.s32 1024, 1024
      %40 = vsyncadd [#allocation5], %s39
      %s41 = sshll.u32 [#allocation6], 4
      %s42 = int_to_ptr.vmem [resolvable:$true] %s41
      %47 = dma.hbm_to_vmem [thread:$0]  %s3, 1024, %s42, [#allocation5], 64, 64, 4
    $region17: #{ptb_model_forward.1} parent=1 // pred_fallthru
      _
    // Predicated region
    $region18: #{ptb_model_forward.1} parent=1 // pred_check
      _
    $region19: #{ptb_model_forward.1} parent=1 // pred_check_branch
      %49 = sbr.rel (0) target = $region21
    $region20: #{ptb_model_forward.1} parent=1 // pred_region
      _
    $region21: #{ptb_model_forward.1} parent=1 // pred_fallthru
      _
    // Predicated region
    $region22: #{ptb_model_forward.1} parent=1 // pred_check
      _
    $region23: #{ptb_model_forward.1} parent=1 // pred_check_branch
      %51 = sbr.rel (0) target = $region25
    $region24: #{ptb_model_forward.1} parent=1 // pred_region
      %52 = dma.done [#allocation3], 512
    $region25: #{ptb_model_forward.1} parent=1 // pred_fallthru
      _
    // Predicated region
    $region26: #{ptb_model_forward.1} parent=1 // pred_check
      _
    $region27: #{ptb_model_forward.1} parent=1 // pred_check_branch
      %54 = sbr.rel (0) target = $region29
    $region28: #{ptb_model_forward.1} parent=1 // pred_region
      %55 = dma.done [#allocation5], 4096
    $region29: #{ptb_model_forward.1} parent=1 // pred_fallthru
      _
    // Predicated region
    $region30: #{ptb_model_forward.1} parent=1 // pred_check
      _
    $region31: #{ptb_model_forward.1} parent=1 // pred_check_branch
      %57 = sbr.rel (0) target = $region33
    $region32: #{ptb_model_forward.1} parent=1 // pred_region
      %58 = dma.done [#allocation5], 1024
    $region33: #{ptb_model_forward.1} parent=1 // pred_fallthru
      _
    %v60 = vld [vmem:[#allocation2] sm:$0xff]
    %v61 = vld [vmem:[#allocation2 + $0x8] sm:$0xff]
    %v62 = vld [vmem:[#allocation2 + $0x10] sm:$0xff]
    %v63 = vld [vmem:[#allocation2 + $0x18] sm:$0xff]
    %v64 = vpack.c.bf16 %v60, %v60
    %v65 = vpack.c.bf16 %v61, %v61
    %v66 = vpack.c.bf16 %v62, %v62
    %v67 = vpack.c.bf16 %v63, %v63
    %v68 = vld [vmem:[#allocation4] sm:$0xf]
    %v69 = vld [vmem:[#allocation4 + $0x4] sm:$0xf]
    %v70 = vld [vmem:[#allocation4 + $0x8] sm:$0xf]
    %v71 = vld [vmem:[#allocation4 + $0xc] sm:$0xf]
    %v72 = vld [vmem:[#allocation4 + $0x10] sm:$0xf]
    %v73 = vld [vmem:[#allocation4 + $0x14] sm:$0xf]
    %v74 = vld [vmem:[#allocation4 + $0x18] sm:$0xf]
    %v75 = vld [vmem:[#allocation4 + $0x1c] sm:$0xf]
    %v76 = vld [vmem:[#allocation4 + $0x20] sm:$0xf]
    %v77 = vld [vmem:[#allocation4 + $0x24] sm:$0xf]
    %v78 = vld [vmem:[#allocation4 + $0x28] sm:$0xf]
    %v79 = vld [vmem:[#allocation4 + $0x2c] sm:$0xf]
    %v80 = vld [vmem:[#allocation4 + $0x30] sm:$0xf]
    %v81 = vld [vmem:[#allocation4 + $0x34] sm:$0xf]
    %v82 = vld [vmem:[#allocation4 + $0x38] sm:$0xf]
    %v83 = vld [vmem:[#allocation4 + $0x3c] sm:$0xf]
    %v84 = vld [vmem:[#allocation4 + $0x40] sm:$0xf]
    %v85 = vld [vmem:[#allocation4 + $0x44] sm:$0xf]
    %v86 = vld [vmem:[#allocation4 + $0x48] sm:$0xf]
    %v87 = vld [vmem:[#allocation4 + $0x4c] sm:$0xf]
    %v88 = vld [vmem:[#allocation4 + $0x50] sm:$0xf]
    %v89 = vld [vmem:[#allocation4 + $0x54] sm:$0xf]
    %v90 = vld [vmem:[#allocation4 + $0x58] sm:$0xf]
    %v91 = vld [vmem:[#allocation4 + $0x5c] sm:$0xf]
    %v92 = vld [vmem:[#allocation4 + $0x60] sm:$0xf]
    %v93 = vld [vmem:[#allocation4 + $0x64] sm:$0xf]
    %v94 = vld [vmem:[#allocation4 + $0x68] sm:$0xf]
    %v95 = vld [vmem:[#allocation4 + $0x6c] sm:$0xf]
    %v96 = vld [vmem:[#allocation4 + $0x70] sm:$0xf]
    %v97 = vld [vmem:[#allocation4 + $0x74] sm:$0xf]
    %v98 = vld [vmem:[#allocation4 + $0x78] sm:$0xf]
    %v99 = vld [vmem:[#allocation4 + $0x7c] sm:$0xf]
    %v100 = vld [vmem:[#allocation4 + $0x80] sm:$0xf]
    %v101 = vld [vmem:[#allocation4 + $0x84] sm:$0xf]
    %v102 = vld [vmem:[#allocation4 + $0x88] sm:$0xf]
    %v103 = vld [vmem:[#allocation4 + $0x8c] sm:$0xf]
    %v104 = vld [vmem:[#allocation4 + $0x90] sm:$0xf]
    %v105 = vld [vmem:[#allocation4 + $0x94] sm:$0xf]
    %v106 = vld [vmem:[#allocation4 + $0x98] sm:$0xf]
    %v107 = vld [vmem:[#allocation4 + $0x9c] sm:$0xf]
    %v108 = vld [vmem:[#allocation4 + $0xa0] sm:$0xf]
    %v109 = vld [vmem:[#allocation4 + $0xa4] sm:$0xf]
    %v110 = vld [vmem:[#allocation4 + $0xa8] sm:$0xf]
    %v111 = vld [vmem:[#allocation4 + $0xac] sm:$0xf]
    %v112 = vld [vmem:[#allocation4 + $0xb0] sm:$0xf]
    %v113 = vld [vmem:[#allocation4 + $0xb4] sm:$0xf]
    %v114 = vld [vmem:[#allocation4 + $0xb8] sm:$0xf]
    %v115 = vld [vmem:[#allocation4 + $0xbc] sm:$0xf]
    %v116 = vld [vmem:[#allocation4 + $0xc0] sm:$0xf]
    %v117 = vld [vmem:[#allocation4 + $0xc4] sm:$0xf]
    %v118 = vld [vmem:[#allocation4 + $0xc8] sm:$0xf]
    %v119 = vld [vmem:[#allocation4 + $0xcc] sm:$0xf]
    %v120 = vld [vmem:[#allocation4 + $0xd0] sm:$0xf]
    %v121 = vld [vmem:[#allocation4 + $0xd4] sm:$0xf]
    %v122 = vld [vmem:[#allocation4 + $0xd8] sm:$0xf]
    %v123 = vld [vmem:[#allocation4 + $0xdc] sm:$0xf]
    %v124 = vld [vmem:[#allocation4 + $0xe0] sm:$0xf]
    %v125 = vld [vmem:[#allocation4 + $0xe4] sm:$0xf]
    %v126 = vld [vmem:[#allocation4 + $0xe8] sm:$0xf]
    %v127 = vld [vmem:[#allocation4 + $0xec] sm:$0xf]
    %v128 = vld [vmem:[#allocation4 + $0xf0] sm:$0xf]
    %v129 = vld [vmem:[#allocation4 + $0xf4] sm:$0xf]
    %v130 = vld [vmem:[#allocation4 + $0xf8] sm:$0xf]
    %v131 = vld [vmem:[#allocation4 + $0xfc] sm:$0xf]
    %v132 = vld [vmem:[%s2] sm:$0x1]
    %v134 = vlaneseq
    %v135 = vshrl.u32 %v134, 7
    %v136 = vsub.s32 0, %v135
    %v137 = vrot.slane %v132, %v136
    %v203 = vunpack.c.l.b16 %v68
    %v204 = vunpack.c.l.b16 %v69
    %v205 = vunpack.c.l.b16 %v70
    %v206 = vunpack.c.l.b16 %v71
    %v207 = vunpack.c.l.b16 %v72
    %v208 = vunpack.c.l.b16 %v73
    %v209 = vunpack.c.l.b16 %v74
    %v210 = vunpack.c.l.b16 %v75
    %v211 = vunpack.c.l.b16 %v76
    %v212 = vunpack.c.l.b16 %v77
    %v213 = vunpack.c.l.b16 %v78
    %v214 = vunpack.c.l.b16 %v79
    %v215 = vunpack.c.l.b16 %v80
    %v216 = vunpack.c.l.b16 %v81
    %v217 = vunpack.c.l.b16 %v82
    %v218 = vunpack.c.l.b16 %v83
    %v219 = vunpack.c.l.b16 %v84
    %v220 = vunpack.c.l.b16 %v85
    %v221 = vunpack.c.l.b16 %v86
    %v222 = vunpack.c.l.b16 %v87
    %v223 = vunpack.c.l.b16 %v88
    %v224 = vunpack.c.l.b16 %v89
    %v225 = vunpack.c.l.b16 %v90
    %v226 = vunpack.c.l.b16 %v91
    %v227 = vunpack.c.l.b16 %v92
    %v228 = vunpack.c.l.b16 %v93
    %v229 = vunpack.c.l.b16 %v94
    %v230 = vunpack.c.l.b16 %v95
    %v231 = vunpack.c.l.b16 %v96
    %v232 = vunpack.c.l.b16 %v97
    %v233 = vunpack.c.l.b16 %v98
    %v234 = vunpack.c.l.b16 %v99
    %v235 = vunpack.c.l.b16 %v100
    %v236 = vunpack.c.l.b16 %v101
    %v237 = vunpack.c.l.b16 %v102
    %v238 = vunpack.c.l.b16 %v103
    %v239 = vunpack.c.l.b16 %v104
    %v240 = vunpack.c.l.b16 %v105
    %v241 = vunpack.c.l.b16 %v106
    %v242 = vunpack.c.l.b16 %v107
    %v243 = vunpack.c.l.b16 %v108
    %v244 = vunpack.c.l.b16 %v109
    %v245 = vunpack.c.l.b16 %v110
    %v246 = vunpack.c.l.b16 %v111
    %v247 = vunpack.c.l.b16 %v112
    %v248 = vunpack.c.l.b16 %v113
    %v249 = vunpack.c.l.b16 %v114
    %v250 = vunpack.c.l.b16 %v115
    %v251 = vunpack.c.l.b16 %v116
    %v252 = vunpack.c.l.b16 %v117
    %v253 = vunpack.c.l.b16 %v118
    %v254 = vunpack.c.l.b16 %v119
    %v255 = vunpack.c.l.b16 %v120
    %v256 = vunpack.c.l.b16 %v121
    %v257 = vunpack.c.l.b16 %v122
    %v258 = vunpack.c.l.b16 %v123
    %v259 = vunpack.c.l.b16 %v124
    %v260 = vunpack.c.l.b16 %v125
    %v261 = vunpack.c.l.b16 %v126
    %v262 = vunpack.c.l.b16 %v127
    %v263 = vunpack.c.l.b16 %v128
    %v264 = vunpack.c.l.b16 %v129
    %v265 = vunpack.c.l.b16 %v130
    %v266 = vunpack.c.l.b16 %v131
    %v267 = vpack.c.b16 %v204, %v203
    %v268 = vpack.c.b16 %v206, %v205
    %v269 = vpack.c.b16 %v208, %v207
    %v270 = vpack.c.b16 %v210, %v209
    %v271 = vpack.c.b16 %v212, %v211
    %v272 = vpack.c.b16 %v214, %v213
    %v273 = vpack.c.b16 %v216, %v215
    %v274 = vpack.c.b16 %v218, %v217
    %v275 = vpack.c.b16 %v220, %v219
    %v276 = vpack.c.b16 %v222, %v221
    %v277 = vpack.c.b16 %v224, %v223
    %v278 = vpack.c.b16 %v226, %v225
    %v279 = vpack.c.b16 %v228, %v227
    %v280 = vpack.c.b16 %v230, %v229
    %v281 = vpack.c.b16 %v232, %v231
    %v282 = vpack.c.b16 %v234, %v233
    %v283 = vpack.c.b16 %v236, %v235
    %v284 = vpack.c.b16 %v238, %v237
    %v285 = vpack.c.b16 %v240, %v239
    %v286 = vpack.c.b16 %v242, %v241
    %v287 = vpack.c.b16 %v244, %v243
    %v288 = vpack.c.b16 %v246, %v245
    %v289 = vpack.c.b16 %v248, %v247
    %v290 = vpack.c.b16 %v250, %v249
    %v291 = vpack.c.b16 %v252, %v251
    %v292 = vpack.c.b16 %v254, %v253
    %v293 = vpack.c.b16 %v256, %v255
    %v294 = vpack.c.b16 %v258, %v257
    %v295 = vpack.c.b16 %v260, %v259
    %v296 = vpack.c.b16 %v262, %v261
    %v297 = vpack.c.b16 %v264, %v263
    %v298 = vpack.c.b16 %v266, %v265
    %331 = vmatprep.subr.bf16.mxu0 0
    %332 = vmatpush1.bf16.msra.mxu0 %v267
    %333 = vmatprep.subr.bf16.mxu0 0
    %334 = vmatpush1.bf16.msra.mxu0 %v268
    %335 = vmatprep.subr.bf16.mxu0 0
    %336 = vmatpush1.bf16.msra.mxu0 %v269
    %337 = vmatprep.subr.bf16.mxu0 0
    %338 = vmatpush1.bf16.msra.mxu0 %v270
    %339 = vmatprep.subr.bf16.mxu0 0
    %340 = vmatpush1.bf16.msra.mxu0 %v271
    %341 = vmatprep.subr.bf16.mxu0 0
    %342 = vmatpush1.bf16.msra.mxu0 %v272
    %343 = vmatprep.subr.bf16.mxu0 0
    %344 = vmatpush1.bf16.msra.mxu0 %v273
    %345 = vmatprep.subr.bf16.mxu0 0
    %346 = vmatpush1.bf16.msra.mxu0 %v274
    %347 = vmatprep.subr.bf16.mxu0 0
    %348 = vmatpush1.bf16.msra.mxu0 %v275
    %349 = vmatprep.subr.bf16.mxu0 0
    %350 = vmatpush1.bf16.msra.mxu0 %v276
    %351 = vmatprep.subr.bf16.mxu0 0
    %352 = vmatpush1.bf16.msra.mxu0 %v277
    %353 = vmatprep.subr.bf16.mxu0 0
    %354 = vmatpush1.bf16.msra.mxu0 %v278
    %355 = vmatprep.subr.bf16.mxu0 0
    %356 = vmatpush1.bf16.msra.mxu0 %v279
    %357 = vmatprep.subr.bf16.mxu0 0
    %358 = vmatpush1.bf16.msra.mxu0 %v280
    %359 = vmatprep.subr.bf16.mxu0 0
    %360 = vmatpush1.bf16.msra.mxu0 %v281
    %361 = vmatprep.subr.bf16.mxu0 0
    %362 = vmatpush1.bf16.msra.mxu0 %v282
    %363 = vmatprep.mubr.bf16.mxu0 %v65
    %364 = vmatmul.mubr.bf16.gmra.mrb[0].mxu0 %v64
    %v365 = vpop.f32.mrb[0].mxu0
    %v366 = vadd.f32 %v137, %v365
    %v367 = vpop.f32.mrb[0].mxu0
    %v368 = vpop.f32.mrb[0].mxu0
    %v369 = vpop.f32.mrb[0].mxu0
    %370 = vdwg.mxu0
    %371 = vmatprep.subr.bf16.mxu0 0
    %372 = vmatpush1.bf16.msra.mxu0 %v283
    %373 = vmatprep.subr.bf16.mxu0 0
    %374 = vmatpush1.bf16.msra.mxu0 %v284
    %375 = vmatprep.subr.bf16.mxu0 0
    %376 = vmatpush1.bf16.msra.mxu0 %v285
    %377 = vmatprep.subr.bf16.mxu0 0
    %378 = vmatpush1.bf16.msra.mxu0 %v286
    %379 = vmatprep.subr.bf16.mxu0 0
    %380 = vmatpush1.bf16.msra.mxu0 %v287
    %381 = vmatprep.subr.bf16.mxu0 0
    %382 = vmatpush1.bf16.msra.mxu0 %v288
    %383 = vmatprep.subr.bf16.mxu0 0
    %384 = vmatpush1.bf16.msra.mxu0 %v289
    %385 = vmatprep.subr.bf16.mxu0 0
    %386 = vmatpush1.bf16.msra.mxu0 %v290
    %387 = vmatprep.subr.bf16.mxu0 0
    %388 = vmatpush1.bf16.msra.mxu0 %v291
    %389 = vmatprep.subr.bf16.mxu0 0
    %390 = vmatpush1.bf16.msra.mxu0 %v292
    %391 = vmatprep.subr.bf16.mxu0 0
    %392 = vmatpush1.bf16.msra.mxu0 %v293
    %393 = vmatprep.subr.bf16.mxu0 0
    %394 = vmatpush1.bf16.msra.mxu0 %v294
    %395 = vmatprep.subr.bf16.mxu0 0
    %396 = vmatpush1.bf16.msra.mxu0 %v295
    %397 = vmatprep.subr.bf16.mxu0 0
    %398 = vmatpush1.bf16.msra.mxu0 %v296
    %399 = vmatprep.subr.bf16.mxu0 0
    %400 = vmatpush1.bf16.msra.mxu0 %v297
    %401 = vmatprep.subr.bf16.mxu0 0
    %402 = vmatpush1.bf16.msra.mxu0 %v298
    %403 = vmatprep.mubr.bf16.mxu0 %v67
    %404 = vmatmul.mubr.bf16.gmra.mrb[0].mxu0 %v66
    %v405 = vpop.f32.mrb[0].mxu0
    %v406 = vadd.f32 %v366, %v405
    %v407 = vpop.f32.mrb[0].mxu0
    %v408 = vpop.f32.mrb[0].mxu0
    %v409 = vpop.f32.mrb[0].mxu0
    %410 = vdwg.mxu0
    %v411 = vmax.f32 %v406, 0.0
    %v412 = vpack.c.bf16 %v411, %v411
    %v413 = vld [vmem:[#allocation6] sm:$0xf]
    %v414 = vld [vmem:[#allocation6 + $0x4] sm:$0xf]
    %v415 = vld [vmem:[#allocation6 + $0x8] sm:$0xf]
    %v416 = vld [vmem:[#allocation6 + $0xc] sm:$0xf]
    %v417 = vld [vmem:[#allocation6 + $0x10] sm:$0xf]
    %v418 = vld [vmem:[#allocation6 + $0x14] sm:$0xf]
    %v419 = vld [vmem:[#allocation6 + $0x18] sm:$0xf]
    %v420 = vld [vmem:[#allocation6 + $0x1c] sm:$0xf]
    %v421 = vld [vmem:[#allocation6 + $0x20] sm:$0xf]
    %v422 = vld [vmem:[#allocation6 + $0x24] sm:$0xf]
    %v423 = vld [vmem:[#allocation6 + $0x28] sm:$0xf]
    %v424 = vld [vmem:[#allocation6 + $0x2c] sm:$0xf]
    %v425 = vld [vmem:[#allocation6 + $0x30] sm:$0xf]
    %v426 = vld [vmem:[#allocation6 + $0x34] sm:$0xf]
    %v427 = vld [vmem:[#allocation6 + $0x38] sm:$0xf]
    %v428 = vld [vmem:[#allocation6 + $0x3c] sm:$0xf]
    %v429 = vld [vmem:[%s4] sm:$0x1]
    %v431 = vlaneseq
    %v432 = vshrl.u32 %v431, 7
    %v433 = vsub.s32 0, %v432
    %v434 = vrot.slane %v429, %v433
    %v452 = vunpack.c.l.b16 %v413
    %v453 = vunpack.c.l.b16 %v414
    %v454 = vunpack.c.l.b16 %v415
    %v455 = vunpack.c.l.b16 %v416
    %v456 = vunpack.c.l.b16 %v417
    %v457 = vunpack.c.l.b16 %v418
    %v458 = vunpack.c.l.b16 %v419
    %v459 = vunpack.c.l.b16 %v420
    %v460 = vunpack.c.l.b16 %v421
    %v461 = vunpack.c.l.b16 %v422
    %v462 = vunpack.c.l.b16 %v423
    %v463 = vunpack.c.l.b16 %v424
    %v464 = vunpack.c.l.b16 %v425
    %v465 = vunpack.c.l.b16 %v426
    %v466 = vunpack.c.l.b16 %v427
    %v467 = vunpack.c.l.b16 %v428
    %v468 = vpack.c.b16 %v453, %v452
    %v469 = vpack.c.b16 %v455, %v454
    %v470 = vpack.c.b16 %v457, %v456
    %v471 = vpack.c.b16 %v459, %v458
    %v472 = vpack.c.b16 %v461, %v460
    %v473 = vpack.c.b16 %v463, %v462
    %v474 = vpack.c.b16 %v465, %v464
    %v475 = vpack.c.b16 %v467, %v466
    %484 = vmatprep.subr.bf16.mxu0 0
    %485 = vmatpush1.bf16.msra.mxu0 %v468
    %486 = vmatprep.subr.bf16.mxu0 0
    %487 = vmatpush1.bf16.msra.mxu0 %v469
    %488 = vmatprep.subr.bf16.mxu0 0
    %489 = vmatpush1.bf16.msra.mxu0 %v470
    %490 = vmatprep.subr.bf16.mxu0 0
    %491 = vmatpush1.bf16.msra.mxu0 %v471
    %492 = vmatprep.subr.bf16.mxu0 0
    %493 = vmatpush1.bf16.msra.mxu0 %v472
    %494 = vmatprep.subr.bf16.mxu0 0
    %495 = vmatpush1.bf16.msra.mxu0 %v473
    %496 = vmatprep.subr.bf16.mxu0 0
    %497 = vmatpush1.bf16.msra.mxu0 %v474
    %498 = vmatprep.subr.bf16.mxu0 0
    %499 = vmatpush1.bf16.msra.mxu0 %v475
    %500 = vmatprep.subr.bf16.mxu0 0
    %501 = vmatpush1.bf16.msra.mxu0 0
    %502 = vmatprep.subr.bf16.mxu0 0
    %503 = vmatpush1.bf16.msra.mxu0 0
    %504 = vmatprep.subr.bf16.mxu0 0
    %505 = vmatpush1.bf16.msra.mxu0 0
    %506 = vmatprep.subr.bf16.mxu0 0
    %507 = vmatpush1.bf16.msra.mxu0 0
    %508 = vmatprep.subr.bf16.mxu0 0
    %509 = vmatpush1.bf16.msra.mxu0 0
    %510 = vmatprep.subr.bf16.mxu0 0
    %511 = vmatpush1.bf16.msra.mxu0 0
    %512 = vmatprep.subr.bf16.mxu0 0
    %513 = vmatpush1.bf16.msra.mxu0 0
    %514 = vmatprep.subr.bf16.mxu0 0
    %515 = vmatpush1.bf16.msra.mxu0 0
    %516 = vmatprep.mubr.bf16.mxu0 0
    %517 = vmatmul.mubr.bf16.gmra.mrb[0].mxu0 %v412
    %v518 = vpop.f32.mrb[0].mxu0
    %v519 = vadd.f32 %v434, %v518
    %v520 = vpop.f32.mrb[0].mxu0
    %v521 = vpop.f32.mrb[0].mxu0
    %v522 = vpop.f32.mrb[0].mxu0
    %523 = vdwg.mxu0
    %v524 = vxor.u32 %v519, 2147483648
    %v525 = vmul.f32 %v524, 1.442695
    %v526 = vpow.pop %v525
    %v527 = vadd.f32 %v526, 1.0
    %v528 = vrcp.pop %v527
    %v529 = vmul.f32 1.0, %v528
    %v530 = vpack.c.bf16 %v529, %v529
    %531 = vst [vmem:[%s5] sm:$0xf] %v530
    // Predicated region
    $region34: #{ptb_model_forward.1} parent=1 // pred_check
      _
    $region35: #{ptb_model_forward.1} parent=1 // pred_check_branch
      %533 = sbr.rel (0) target = $region37
    $region36: #{ptb_model_forward.1} parent=1 // pred_region
      _
    $region37: #{ptb_model_forward.1} parent=1 // pred_fallthru
      _
    // Predicated region
    $region38: #{ptb_model_forward.1} parent=1 // pred_check
      _
    $region39: #{ptb_model_forward.1} parent=1 // pred_check_branch
      %535 = sbr.rel (0) target = $region41
    $region40: #{ptb_model_forward.1} parent=1 // pred_region
      _
    $region41: #{ptb_model_forward.1} parent=1 // pred_fallthru
      _
    %536 = vsyncpa [#allocation3], 1
    %537 = vsyncpa [#allocation5], 1

</llo_original>
